<compile_context>
chip_gen: v6e
topology: v6e:2x2x1
jax: 0.10.0
libtpu: 0.0.40
codegen_flags: <defaults>
</compile_context>

<pallas_src>
import functools

import jax
import jax.numpy as jnp
from jax.experimental import pallas as pl
from jax.experimental.pallas import tpu as pltpu

_MIB = 1024 * 1024


def _round_up(x, m):
    return (x + m - 1) // m * m


def _tpu_budgets():
    """Generation-aware budgets: (tile_budget, vmem_limit, min_dma_bytes, cores)."""
    vmem = 64 * _MIB  # conservative default, safe on every generation
    try:
        info = pltpu.get_tpu_info()
        vmem = int(getattr(info, "vmem_capacity_bytes", vmem)) or vmem
    except Exception:
        pass
    if vmem <= 64 * _MIB:
        # v7x-like: 64 MiB VMEM per TensorCore, 2 TCs share the 'parallel' grid axis.
        return 22 * _MIB, 48 * _MIB, 4 * _MIB, 2
    # v5e / v6e: 128 MiB VMEM, single TensorCore.
    return 56 * _MIB, 100 * _MIB, 2 * _MIB, 1


def _choose_batch_tiling(B, per_row_dir, tile_budget, min_dma, cores):
    """Pick (TB, padded B) for the fused single-pass kernel, or None if a single
    (C, Lp) row does not fit the pipeline budget (two-pass fallback needed).

    per_row_dir = bytes of one batch row per transfer direction (C * Lp * itemsize).
    The auto-pipeline keeps 2x input + 2x output tiles live -> 4 * per_row_dir / row.
    """
    row_pipe = 4 * per_row_dir
    tb_max = tile_budget // row_pipe
    if tb_max < 1:
        return None
    tb = max(1, min(B, tb_max))
    if cores > 1 and B >= cores:
        # v7x: make the grid length a multiple of the core count so both TCs get work,
        # but only if per-direction DMAs stay >= min_dma (the ~0.35us/step overhead and
        # tiny-DMA regime is worse than a little core imbalance for small tensors).
        g = _round_up(max(pl.cdiv(B, tb), cores), cores)
        tb_bal = max(1, pl.cdiv(B, g))
        if tb_bal * per_row_dir >= min_dma:
            tb = tb_bal
    bp = _round_up(B, tb)  # pad B instead of shrinking TB -> no ragged trailing block
    return tb, bp


# ----------------------------------------------------------------------------- kernels


def _fused_kernel(x_ref, w1t_ref, b1_ref, w2t_ref, b2_ref, o_ref, *, inv_l):
    # x_ref / o_ref: (TB, C, Lp) tile.  Weights pre-transposed:
    #   w1t (C, Cr), b1 (1, Cr), w2t (Cr, C), b2 (1, C).
    # AdaptiveAvgPool1d(1): exact mean over the true L (zero padding contributes 0).
    pooled = jnp.sum(x_ref[...], axis=-1, dtype=jnp.float32) * jnp.float32(inv_l)  # (TB, C)

    # fc1 + ReLU, fc2 + Sigmoid -- one tiny MXU pass each for the whole batch tile.
    h = jnp.dot(pooled, w1t_ref[...], preferred_element_type=jnp.float32) + b1_ref[...]
    h = jnp.maximum(h, 0.0)
    s = jnp.dot(h, w2t_ref[...], preferred_element_type=jnp.float32) + b2_ref[...]
    s = jax.nn.sigmoid(s)                                                          # (TB, C)

    # Re-read x from its VMEM buffer for the scale: only pooled / s stay live across
    # the MLP, so no second (TB, C, Lp)-sized temporary is materialized.
    o_ref[...] = (x_ref[...] * s.astype(o_ref.dtype)[:, :, None]).astype(o_ref.dtype)


def _pool_sum_kernel(x_ref, sum_ref):
    # Accumulate per-channel f32 sums across the 'arbitrary' L axis.
    @pl.when(pl.program_id(1) == 0)
    def _():
        sum_ref[...] = jnp.zeros_like(sum_ref)

    sum_ref[...] += jnp.sum(x_ref[...], axis=-1, dtype=jnp.float32)


def _scale_kernel(x_ref, gate_ref, o_ref):
    o_ref[...] = (x_ref[...] * gate_ref[...].astype(o_ref.dtype)[:, :, None]).astype(o_ref.dtype)


# ------------------------------------------------------------------------------ passes


def _single_pass(xp, w1t, b1r, w2t, b2r, inv_l, TB, vmem_limit, true_sizes):
    Bp, C, Lp = xp.shape
    Cr = w1t.shape[1]
    B, L, itemsize = true_sizes

    cost = pl.CostEstimate(
        flops=2 * B * C * L + 4 * B * C * Cr,       # pool + scale + two tiny matmuls
        bytes_accessed=2 * B * C * L * itemsize,    # read x once + write out (HBM-bound)
        transcendentals=B * C,                      # sigmoid
    )

    return pl.pallas_call(
        functools.partial(_fused_kernel, inv_l=inv_l),
        out_shape=jax.ShapeDtypeStruct((Bp, C, Lp), xp.dtype),
        grid_spec=pltpu.PrefetchScalarGridSpec(
            num_scalar_prefetch=0,
            grid=(Bp // TB,),
            in_specs=[
                pl.BlockSpec((TB, C, Lp), lambda b: (b, 0, 0)),   # x batch tile
                pl.BlockSpec((C, Cr), lambda b: (0, 0)),          # W1^T (replicated)
                pl.BlockSpec((1, Cr), lambda b: (0, 0)),          # b1
                pl.BlockSpec((Cr, C), lambda b: (0, 0)),          # W2^T (replicated)
                pl.BlockSpec((1, C), lambda b: (0, 0)),           # b2
            ],
            out_specs=pl.BlockSpec((TB, C, Lp), lambda b: (b, 0, 0)),
        ),
        compiler_params=pltpu.CompilerParams(
            dimension_semantics=("parallel",),
            vmem_limit_bytes=vmem_limit,
        ),
        cost_estimate=cost,
    )(xp, w1t, b1r, w2t, b2r)


def _two_pass(x, w1t, b1r, w2t, b2r, inv_l, Lp, tile_budget, vmem_limit):
    """Fallback when a single (C, L) row is too large for VMEM: L-tiled two-pass."""
    B, C, L = x.shape
    dtype = x.dtype
    itemsize = jnp.dtype(dtype).itemsize

    # Sublane-aligned batch tiling for the (TB, C) sum / gate blocks.
    if B <= 8:
        TB, Bp = B, B
    else:
        TB, Bp = 8, _round_up(B, 8)

    # Largest L tile (multiple of 128) so 2x in + 2x out blocks fit the budget.
    tl_max = max(1, tile_budget // (4 * TB * C * itemsize))
    TL = max(128, (tl_max // 128) * 128)
    TL = min(TL, Lp)
    Lpp = _round_up(Lp, TL)

    xp = x
    if Bp != B or Lpp != L:
        xp = jnp.pad(x, ((0, Bp - B), (0, 0), (0, Lpp - L)))

    grid = (Bp // TB, Lpp // TL)

    # Pass 1: per-channel f32 sums (L axis is a resident-accumulator reduction).
    sums = pl.pallas_call(
        _pool_sum_kernel,
        out_shape=jax.ShapeDtypeStruct((Bp, C), jnp.float32),
        grid_spec=pltpu.PrefetchScalarGridSpec(
            num_scalar_prefetch=0,
            grid=grid,
            in_specs=[pl.BlockSpec((TB, C, TL), lambda b, l: (b, 0, l))],
            out_specs=pl.BlockSpec((TB, C), lambda b, l: (b, 0)),
        ),
        compiler_params=pltpu.CompilerParams(
            dimension_semantics=("parallel", "arbitrary"),
            vmem_limit_bytes=vmem_limit,
        ),
    )(xp)

    # Tiny MLP gate in plain JAX (negligible next to the two HBM-bound passes).
    pooled = sums * jnp.float32(inv_l)
    h = jnp.maximum(pooled @ w1t + b1r, 0.0)
    gate = jax.nn.sigmoid(h @ w2t + b2r).astype(jnp.float32)        # (Bp, C)

    # Pass 2: re-stream x and apply the sigmoid channel gate tile-by-tile.
    return pl.pallas_call(
        _scale_kernel,
        out_shape=jax.ShapeDtypeStruct((Bp, C, Lpp), dtype),
        grid_spec=pltpu.PrefetchScalarGridSpec(
            num_scalar_prefetch=0,
            grid=grid,
            in_specs=[
                pl.BlockSpec((TB, C, TL), lambda b, l: (b, 0, l)),
                pl.BlockSpec((TB, C), lambda b, l: (b, 0)),
            ],
            out_specs=pl.BlockSpec((TB, C, TL), lambda b, l: (b, 0, l)),
        ),
        compiler_params=pltpu.CompilerParams(
            dimension_semantics=("parallel", "parallel"),
            vmem_limit_bytes=vmem_limit,
        ),
    )(xp, gate)


# ----------------------------------------------------------------------------- wrapper


def channel_attention(x, w1, b1, w2, b2, *, force_two_pass=False):
    """x: (B, C, L); w1: (Cr, C); b1: (Cr,); w2: (C, Cr); b2: (C,)."""
    x = jnp.asarray(x)
    B, C, L = x.shape
    Cr = w1.shape[0]
    itemsize = jnp.dtype(x.dtype).itemsize

    tile_budget, vmem_limit, min_dma, cores = _tpu_budgets()

    # Lane-dense stores: pad L with zeros to a multiple of 128 (sum unchanged; divide
    # by the true L), crop after the call.
    Lp = max(128, _round_up(L, 128))
    inv_l = 1.0 / float(L)

    # Orient weights for row-vector matmuls inside the kernel (plain-JAX glue).
    w1t = jnp.asarray(w1).T               # (C, Cr)
    w2t = jnp.asarray(w2).T               # (Cr, C)
    b1r = jnp.asarray(b1).reshape(1, Cr)  # (1, Cr)
    b2r = jnp.asarray(b2).reshape(1, C)   # (1, C)

    # TODO(synk): if C is far from a sublane multiple (8 for f32 / 16 for bf16),
    # a 2-D (B*C, L) slab layout would avoid per-row sublane padding of the blocks.

    per_row_dir = C * Lp * itemsize
    tiling = None
    if not force_two_pass:
        tiling = _choose_batch_tiling(B, per_row_dir, tile_budget, min_dma, cores)

    if tiling is not None:
        TB, Bp = tiling
        xp = x
        if Bp != B or Lp != L:
            xp = jnp.pad(x, ((0, Bp - B), (0, 0), (0, Lp - L)))
        out = _single_pass(xp, w1t, b1r, w2t, b2r, inv_l, TB, vmem_limit,
                           true_sizes=(B, L, itemsize))
    else:
        out = _two_pass(x, w1t, b1r, w2t, b2r, inv_l, Lp, tile_budget, vmem_limit)

    if out.shape != (B, C, L):
        out = out[:B, :, :L]
    return out


def channel_attention_ref(x, w1, b1, w2, b2):
    # Pure-JAX reference mirroring the PyTorch forward.
    y = jnp.mean(x, axis=-1)                         # (B, C)
    y = jnp.maximum(y @ w1.T + b1, 0.0)              # (B, Cr)
    y = jax.nn.sigmoid(y @ w2.T + b2)                # (B, C)
    return x * y[..., None]


if __name__ == "__main__":
    # Small shapes consistent with the module: in_channels=16, reduction=4.
    # B=3 (awkward batch) and L=200 (not a multiple of 128) exercise the padding paths.
    B, C, L = 3, 16, 200
    reduction = 4
    Cr = C // reduction

    key = jax.random.PRNGKey(0)
    kx, k1, k2, k3, k4 = jax.random.split(key, 5)

    x = jax.random.normal(kx, (B, C, L), dtype=jnp.float32)

    # Deterministic parameter init (nn.Linear shapes; uniform like PyTorch default).
    bound1 = 1.0 / jnp.sqrt(C)
    w1 = jax.random.uniform(k1, (Cr, C), jnp.float32, -bound1, bound1)
    b1 = jax.random.uniform(k2, (Cr,), jnp.float32, -bound1, bound1)
    bound2 = 1.0 / jnp.sqrt(Cr)
    w2 = jax.random.uniform(k3, (C, Cr), jnp.float32, -bound2, bound2)
    b2 = jax.random.uniform(k4, (C,), jnp.float32, -bound2, bound2)

    ref = channel_attention_ref(x, w1, b1, w2, b2)

    # Fused single-pass path.
    out = jax.block_until_ready(channel_attention(x, w1, b1, w2, b2))
    assert out.shape == (B, C, L)
    assert jnp.allclose(out, ref, atol=1e-5, rtol=1e-5), "fused path mismatch vs reference"

    # Large-row two-pass fallback (forced on small data to validate the path).
    out2 = jax.block_until_ready(channel_attention(x, w1, b1, w2, b2, force_two_pass=True))
    assert out2.shape == (B, C, L)
    assert jnp.allclose(out2, ref, atol=1e-5, rtol=1e-5), "two-pass path mismatch vs reference"

    print("KERNEL_OK")
</pallas_src>

<mosaic_0001>
module attributes {stable_mosaic.version = 11 : i64} {
  func.func @_fused_kernel(%arg0: i32, %arg1: memref<3x16x256xf32, #tpu.memory_space<vmem>>, %arg2: memref<16x4xf32, #tpu.memory_space<vmem>>, %arg3: memref<1x4xf32, #tpu.memory_space<vmem>>, %arg4: memref<4x16xf32, #tpu.memory_space<vmem>>, %arg5: memref<1x16xf32, #tpu.memory_space<vmem>>, %arg6: memref<3x16x256xf32, #tpu.memory_space<vmem>>) attributes {dimension_semantics = [#tpu.dimension_semantics<parallel>], iteration_bounds = array<i64: 1>, scalar_prefetch = 0 : i64, scratch_operands = 0 : i64, tpu.core_type = #tpu.core_type<tc>, window_params = [{transform_indices = @transform_0, window_bounds = array<i64: 3, 16, 256>}, {pipeline_mode = #tpu.pipeline_mode<synchronous>, transform_indices = @transform_1, window_bounds = array<i64: 16, 4>}, {pipeline_mode = #tpu.pipeline_mode<synchronous>, transform_indices = @transform_2, window_bounds = array<i64: 1, 4>}, {pipeline_mode = #tpu.pipeline_mode<synchronous>, transform_indices = @transform_3, window_bounds = array<i64: 4, 16>}, {pipeline_mode = #tpu.pipeline_mode<synchronous>, transform_indices = @transform_4, window_bounds = array<i64: 1, 16>}, {transform_indices = @transform_5, window_bounds = array<i64: 3, 16, 256>}]} {
    %c0 = arith.constant 0 : index
    %c0_0 = arith.constant 0 : index
    %c0_1 = arith.constant 0 : index
    %0 = vector.load %arg1[%c0, %c0_0, %c0_1] : memref<3x16x256xf32, #tpu.memory_space<vmem>>, vector<3x16x256xf32>
    %cst = arith.constant dense<0.000000e+00> : vector<3x16xf32>
    %1 = vector.multi_reduction <add>, %0, %cst [2] : vector<3x16x256xf32> to vector<3x16xf32>
    %cst_2 = arith.constant 5.000000e-03 : f32
    %2 = vector.broadcast %cst_2 : f32 to vector<3x16xf32>
    %3 = arith.mulf %1, %2 : vector<3x16xf32>
    %c0_3 = arith.constant 0 : index
    %c0_4 = arith.constant 0 : index
    %4 = vector.load %arg2[%c0_3, %c0_4] : memref<16x4xf32, #tpu.memory_space<vmem>>, vector<16x4xf32>
    %cst_5 = arith.constant dense<0.000000e+00> : vector<3x4xf32>
    %5 = tpu.matmul %3, %4, %cst_5 {dimension_numbers = #tpu.dot_dimension_numbers<[1], [0], [0], [1], [0, 0, 1, 1], [], []>} : vector<3x16xf32>, vector<16x4xf32>, vector<3x4xf32> -> vector<3x4xf32>
    %c0_6 = arith.constant 0 : index
    %c0_7 = arith.constant 0 : index
    %6 = vector.load %arg3[%c0_6, %c0_7] : memref<1x4xf32, #tpu.memory_space<vmem>>, vector<1x4xf32>
    %7 = vector.broadcast %6 : vector<1x4xf32> to vector<3x4xf32>
    %8 = arith.addf %5, %7 : vector<3x4xf32>
    %cst_8 = arith.constant 0.000000e+00 : f32
    %9 = vector.broadcast %cst_8 : f32 to vector<3x4xf32>
    %10 = arith.maximumf %8, %9 : vector<3x4xf32>
    %c0_9 = arith.constant 0 : index
    %c0_10 = arith.constant 0 : index
    %11 = vector.load %arg4[%c0_9, %c0_10] : memref<4x16xf32, #tpu.memory_space<vmem>>, vector<4x16xf32>
    %cst_11 = arith.constant dense<0.000000e+00> : vector<3x16xf32>
    %12 = tpu.matmul %10, %11, %cst_11 {dimension_numbers = #tpu.dot_dimension_numbers<[1], [0], [0], [1], [0, 0, 1, 1], [], []>} : vector<3x4xf32>, vector<4x16xf32>, vector<3x16xf32> -> vector<3x16xf32>
    %c0_12 = arith.constant 0 : index
    %c0_13 = arith.constant 0 : index
    %13 = vector.load %arg5[%c0_12, %c0_13] : memref<1x16xf32, #tpu.memory_space<vmem>>, vector<1x16xf32>
    %14 = vector.broadcast %13 : vector<1x16xf32> to vector<3x16xf32>
    %15 = arith.addf %12, %14 : vector<3x16xf32>
    %16 = arith.negf %15 : vector<3x16xf32>
    %17 = math.exp %16 : vector<3x16xf32>
    %cst_14 = arith.constant 1.000000e+00 : f32
    %18 = vector.broadcast %cst_14 : f32 to vector<3x16xf32>
    %19 = arith.addf %18, %17 : vector<3x16xf32>
    %20 = arith.divf %18, %19 : vector<3x16xf32>
    %c0_15 = arith.constant 0 : index
    %c0_16 = arith.constant 0 : index
    %c0_17 = arith.constant 0 : index
    %21 = vector.load %arg1[%c0_15, %c0_16, %c0_17] : memref<3x16x256xf32, #tpu.memory_space<vmem>>, vector<3x16x256xf32>
    %22 = vector.shape_cast %20 : vector<3x16xf32> to vector<3x16x1xf32>
    %23 = vector.broadcast %22 : vector<3x16x1xf32> to vector<3x16x256xf32>
    %24 = arith.mulf %21, %23 : vector<3x16x256xf32>
    %c0_18 = arith.constant 0 : index
    %c0_19 = arith.constant 0 : index
    %c0_20 = arith.constant 0 : index
    %25 = vector.load %arg6[%c0_18, %c0_19, %c0_20] : memref<3x16x256xf32, #tpu.memory_space<vmem>>, vector<3x16x256xf32>
    tpu.vector_store %arg6[%c0_18, %c0_19, %c0_20], %24 {strides = array<i32>} : memref<3x16x256xf32, #tpu.memory_space<vmem>>, vector<3x16x256xf32>,
    return
  }
  func.func @transform_0(%arg0: i32) -> (i32, i32, i32) {
    %c0_i32 = arith.constant 0 : i32
    %c0_i32_0 = arith.constant 0 : i32
    %c0_i32_1 = arith.constant 0 : i32
    return %arg0, %c0_i32, %c0_i32_0 : i32, i32, i32
  }
  func.func @transform_1(%arg0: i32) -> (i32, i32) {
    %c0_i32 = arith.constant 0 : i32
    %c0_i32_0 = arith.constant 0 : i32
    %c0_i32_1 = arith.constant 0 : i32
    return %c0_i32, %c0_i32_0 : i32, i32
  }
  func.func @transform_2(%arg0: i32) -> (i32, i32) {
    %c0_i32 = arith.constant 0 : i32
    %c0_i32_0 = arith.constant 0 : i32
    %c0_i32_1 = arith.constant 0 : i32
    return %c0_i32, %c0_i32_0 : i32, i32
  }
  func.func @transform_3(%arg0: i32) -> (i32, i32) {
    %c0_i32 = arith.constant 0 : i32
    %c0_i32_0 = arith.constant 0 : i32
    %c0_i32_1 = arith.constant 0 : i32
    return %c0_i32, %c0_i32_0 : i32, i32
  }
  func.func @transform_4(%arg0: i32) -> (i32, i32) {
    %c0_i32 = arith.constant 0 : i32
    %c0_i32_0 = arith.constant 0 : i32
    %c0_i32_1 = arith.constant 0 : i32
    return %c0_i32, %c0_i32_0 : i32, i32
  }
  func.func @transform_5(%arg0: i32) -> (i32, i32, i32) {
    %c0_i32 = arith.constant 0 : i32
    %c0_i32_0 = arith.constant 0 : i32
    %c0_i32_1 = arith.constant 0 : i32
    return %arg0, %c0_i32, %c0_i32_0 : i32, i32, i32
  }
}

</mosaic_0001>

<llo_original>
// kernel: tpu_custom_call.1
$region0: #{tpu_custom_call.1}
  #allocation0 [shape = 'u32[]', space=smem, size = 0x4, offset = 0x4, fixed_abs, tag = 'smem constant byte address 0x4 - core index']
  #allocation1 [shape = 'u32[144,128]{1,0:T(1,128)}', space=vmem, size = 0x12000, scoped, tag = 'internal scratch']
  %s0 = inlined_call_operand.hbm [shape: f32[3,16,256], index: 0, kind: input, shape index: {}]
  %s1 = inlined_call_operand.vmem [shape: f32[16,4], index: 1, kind: input, shape index: {}]
  %s2 = inlined_call_operand.vmem [shape: f32[1,4], index: 2, kind: input, shape index: {}]
  %s3 = inlined_call_operand.vmem [shape: f32[4,16], index: 3, kind: input, shape index: {}]
  %s4 = inlined_call_operand.vmem [shape: f32[1,16], index: 4, kind: input, shape index: {}]
  %s5 = inlined_call_operand.hbm [shape: f32[3,16,256], index: 5, kind: output, shape index: {}]
  %s6 = sld [smem:[#allocation0]]
  $region34: #{tpu_custom_call.1} parent=0
    _
  %s8 = ssub.s32 1, %s6
  %s9 = scalar_select 0, %s8, %s6
  $region1: #{tpu_custom_call.1} parent=0
    #allocation2 [shape = 'u8[49152]{0}', space=vmem, size = 0xc000, scoped, tag = 'input window, operand 0, single buffered']
    #allocation3 [shape = 's32[1]{0}', space=sflag, size = 0x4, scoped, tag = 'scoped memory for tpu_custom_call.1']
    #allocation4 [shape = 's32[1]{0}', space=sflag, size = 0x4, scoped, tag = 'scoped memory for tpu_custom_call.1']
    #allocation5 [shape = 'u8[49152]{0}', space=vmem, size = 0xc000, scoped, tag = 'output window, operand 0, single buffered']
    %10 = vsyncpa [#allocation3], 0
    %11 = vsyncpa [#allocation4], 0
    // Predicated region
    $region2: #{tpu_custom_call.1} parent=1 // pred_check
      _
    $region3: #{tpu_custom_call.1} parent=1 // pred_check_branch
      %13 = sbr.rel (0) target = $region5
    $region4: #{tpu_custom_call.1} parent=1 // pred_region
      %s15 = ssub.s32 1536, 1536
      %16 = vsyncadd [#allocation3], %s15
      %s17 = sshll.u32 [#allocation2], 4
      %s18 = int_to_ptr.vmem [resolvable:$true] %s17
      %23 = dma.hbm_to_vmem [thread:$0]  %s0, 1536, %s18, [#allocation3], 256, 256, 16
    $region5: #{tpu_custom_call.1} parent=1 // pred_fallthru
      _
    // Predicated region
    $region6: #{tpu_custom_call.1} parent=1 // pred_check
      _
    $region7: #{tpu_custom_call.1} parent=1 // pred_check_branch
      %25 = sbr.rel (0) target = $region9
    $region8: #{tpu_custom_call.1} parent=1 // pred_region
      _
    $region9: #{tpu_custom_call.1} parent=1 // pred_fallthru
      _
    // Predicated region
    $region10: #{tpu_custom_call.1} parent=1 // pred_check
      _
    $region11: #{tpu_custom_call.1} parent=1 // pred_check_branch
      %27 = sbr.rel (0) target = $region13
    $region12: #{tpu_custom_call.1} parent=1 // pred_region
      _
    $region13: #{tpu_custom_call.1} parent=1 // pred_fallthru
      _
    // Predicated region
    $region14: #{tpu_custom_call.1} parent=1 // pred_check
      _
    $region15: #{tpu_custom_call.1} parent=1 // pred_check_branch
      %29 = sbr.rel (0) target = $region17
    $region16: #{tpu_custom_call.1} parent=1 // pred_region
      _
    $region17: #{tpu_custom_call.1} parent=1 // pred_fallthru
      _
    // Predicated region
    $region18: #{tpu_custom_call.1} parent=1 // pred_check
      _
    $region19: #{tpu_custom_call.1} parent=1 // pred_check_branch
      %31 = sbr.rel (0) target = $region21
    $region20: #{tpu_custom_call.1} parent=1 // pred_region
      _
    $region21: #{tpu_custom_call.1} parent=1 // pred_fallthru
      _
    // Predicated region
    $region22: #{tpu_custom_call.1} parent=1 // pred_check
      _
    $region23: #{tpu_custom_call.1} parent=1 // pred_check_branch
      %33 = sbr.rel (0) target = $region25
    $region24: #{tpu_custom_call.1} parent=1 // pred_region
      %34 = dma.done [#allocation3], 1536
    $region25: #{tpu_custom_call.1} parent=1 // pred_fallthru
      _
    %v35 = vld [vmem:[#allocation2] sm:$0xff]
    %v36 = vld [vmem:[#allocation2 + $0x8] sm:$0xff]
    %v37 = vld [vmem:[#allocation2 + $0x10] sm:$0xff]
    %v38 = vld [vmem:[#allocation2 + $0x18] sm:$0xff]
    %v39 = vld [vmem:[#allocation2 + $0x20] sm:$0xff]
    %v40 = vld [vmem:[#allocation2 + $0x28] sm:$0xff]
    %v41 = vld [vmem:[#allocation2 + $0x30] sm:$0xff]
    %v42 = vld [vmem:[#allocation2 + $0x38] sm:$0xff]
    %v43 = vld [vmem:[#allocation2 + $0x40] sm:$0xff]
    %v44 = vld [vmem:[#allocation2 + $0x48] sm:$0xff]
    %v45 = vld [vmem:[#allocation2 + $0x50] sm:$0xff]
    %v46 = vld [vmem:[#allocation2 + $0x58] sm:$0xff]
    %v47 = vadd.f32 %v35, %v36
    %48 = vadd.xlane.f32.xlu0 %v47
    %v49 = vpop.xlane.xlu0 %48
    %v50 = vadd.f32 %v37, %v38
    %51 = vadd.xlane.f32.xlu0 %v50
    %v52 = vpop.xlane.xlu0 %51
    %v53 = vadd.f32 %v39, %v40
    %54 = vadd.xlane.f32.xlu0 %v53
    %v55 = vpop.xlane.xlu0 %54
    %v56 = vadd.f32 %v41, %v42
    %57 = vadd.xlane.f32.xlu0 %v56
    %v58 = vpop.xlane.xlu0 %57
    %v59 = vadd.f32 %v43, %v44
    %60 = vadd.xlane.f32.xlu0 %v59
    %v61 = vpop.xlane.xlu0 %60
    %v62 = vadd.f32 %v45, %v46
    %63 = vadd.xlane.f32.xlu0 %v62
    %v64 = vpop.xlane.xlu0 %63
    %v65 = vmul.f32 %v49, 0.005
    %v66 = vmul.f32 %v52, 0.005
    %v67 = vmul.f32 %v55, 0.005
    %v68 = vmul.f32 %v58, 0.005
    %v69 = vmul.f32 %v61, 0.005
    %v70 = vmul.f32 %v64, 0.005
    %v71 = vld [vmem:[%s1] sm:$0xff]
    %v72 = vld [vmem:[%s1 + $0x8] sm:$0xff]
    %v73 = vld [vmem:[%s2] sm:$0x1]
    %v75 = vlaneseq
    %v76 = vshrl.u32 %v75, 7
    %v77 = vsub.s32 0, %v76
    %v78 = vrot.slane %v73, %v77
    %v86 = vlaneseq
    %v87 = vand.u32 %v86, 127
    %v88 = vlaneseq
    %v89 = vshrl.u32 %v88, 7
    %v90 = vsub.s32 %v87, %v89
    %v91 = vrot.slane %v65, %v90
    %v92 = vadd.s32 %v87, 4294967288
    %v93 = vlaneseq
    %v94 = vshrl.u32 %v93, 7
    %v95 = vsub.s32 %v92, %v94
    %v96 = vrot.slane %v66, %v95
    %vm97 = vcmask 130112
    %v98 = vsel %vm97, %v96, %v91
    %v99 = vlaneseq
    %v100 = vshrl.u32 %v99, 7
    %v101 = vsub.s32 %v87, %v100
    %v102 = vrot.slane %v67, %v101
    %v103 = vlaneseq
    %v104 = vshrl.u32 %v103, 7
    %v105 = vsub.s32 %v92, %v104
    %v106 = vrot.slane %v68, %v105
    %v107 = vsel %vm97, %v106, %v102
    %v108 = vlaneseq
    %v109 = vshrl.u32 %v108, 7
    %v110 = vsub.s32 %v87, %v109
    %v111 = vrot.slane %v69, %v110
    %v112 = vlaneseq
    %v113 = vshrl.u32 %v112, 7
    %v114 = vsub.s32 %v92, %v113
    %v115 = vrot.slane %v70, %v114
    %v116 = vsel %vm97, %v115, %v111
    %vm117 = vcmask 1041409
    %v118 = vsel %vm117, %v107, %v98
    %vm119 = vcmask 1042434
    %v120 = vsel %vm119, %v116, %v118
    %vm121 = vcmask 130048
    %v122 = vsel %vm121, %v120, 0
    %124 = vmatprep.subr.mxu0 0.0
    %125 = vmatpush1.msra.mxu0 0.0
    %126 = vmatprep.subr.mxu0 0.0
    %127 = vmatpush1.msra.mxu0 0.0
    %128 = vmatprep.subr.mxu0 0.0
    %129 = vmatpush1.msra.mxu0 0.0
    %130 = vmatprep.subr.mxu0 0.0
    %131 = vmatpush1.msra.mxu0 0.0
    %132 = vmatprep.subr.mxu0 0.0
    %133 = vmatpush1.msra.mxu0 0.0
    %134 = vmatprep.subr.mxu0 0.0
    %135 = vmatpush1.msra.mxu0 0.0
    %136 = vmatprep.subr.mxu0 0.0
    %137 = vmatpush1.msra.mxu0 0.0
    %138 = vmatprep.subr.mxu0 0.0
    %139 = vmatpush1.msra.mxu0 0.0
    %140 = vmatprep.subr.mxu0 0.0
    %141 = vmatpush1.msra.mxu0 0.0
    %142 = vmatprep.subr.mxu0 0.0
    %143 = vmatpush1.msra.mxu0 0.0
    %144 = vmatprep.subr.mxu0 0.0
    %145 = vmatpush1.msra.mxu0 0.0
    %146 = vmatprep.subr.mxu0 0.0
    %147 = vmatpush1.msra.mxu0 0.0
    %148 = vmatprep.subr.mxu0 0.0
    %149 = vmatpush1.msra.mxu0 0.0
    %150 = vmatprep.subr.mxu0 0.0
    %151 = vmatpush1.msra.mxu0 0.0
    %152 = vmatprep.subr.mxu0 0.0
    %153 = vmatpush1.msra.mxu0 %v72
    %154 = vmatprep.subr.mxu0 0.0
    %155 = vmatpush1.msra.mxu0 %v71
    %156 = vmatprep.subr.mxu0 0.0
    %157 = vmatpush2.msra.mxu0 0.0
    %158 = vmatprep.subr.mxu0 0.0
    %159 = vmatpush2.msra.mxu0 0.0
    %160 = vmatprep.subr.mxu0 0.0
    %161 = vmatpush2.msra.mxu0 0.0
    %162 = vmatprep.subr.mxu0 0.0
    %163 = vmatpush2.msra.mxu0 0.0
    %164 = vmatprep.subr.mxu0 0.0
    %165 = vmatpush2.msra.mxu0 0.0
    %166 = vmatprep.subr.mxu0 0.0
    %167 = vmatpush2.msra.mxu0 0.0
    %168 = vmatprep.subr.mxu0 0.0
    %169 = vmatpush2.msra.mxu0 0.0
    %170 = vmatprep.subr.mxu0 0.0
    %171 = vmatpush2.msra.mxu0 0.0
    %172 = vmatprep.subr.mxu0 0.0
    %173 = vmatpush2.msra.mxu0 0.0
    %174 = vmatprep.subr.mxu0 0.0
    %175 = vmatpush2.msra.mxu0 0.0
    %176 = vmatprep.subr.mxu0 0.0
    %177 = vmatpush2.msra.mxu0 0.0
    %178 = vmatprep.subr.mxu0 0.0
    %179 = vmatpush2.msra.mxu0 0.0
    %180 = vmatprep.subr.mxu0 0.0
    %181 = vmatpush2.msra.mxu0 0.0
    %182 = vmatprep.subr.mxu0 0.0
    %183 = vmatpush2.msra.mxu0 0.0
    %184 = vmatprep.subr.mxu0 0.0
    %185 = vmatpush2.msra.mxu0 0.0
    %186 = vmatprep.subr.mxu0 0.0
    %187 = vmatpush2.msra.mxu0 0.0
    %188 = vmatprep.mubr.f32.mxu0 0.0
    %189 = vmatmul.mubr.f32.gmra.mxu0 %v122
    %v190 = vpop.f32.mrf.mxu0
    %v191 = vadd.f32 %v78, %v190
    %v192 = vpop.f32.mrf.mxu0
    %193 = vdwg.mxu0
    %v194 = vmax.f32 %v191, 0.0
    %v195 = vld [vmem:[%s3] sm:$0xf]
    %v196 = vld [vmem:[%s4] sm:$0x1]
    %v198 = vlaneseq
    %v199 = vshrl.u32 %v198, 7
    %v200 = vsub.s32 0, %v199
    %v201 = vrot.slane %v196, %v200
    %vm203 = vcmask 31744
    %v205 = vsel %vm203, %v194, 0
    %vm207 = vcmask 1043456
    %v209 = vsel %vm207, %v195, 0
    %211 = vmatprep.subr.mxu0 0.0
    %212 = vmatpush1.msra.mxu0 0.0
    %213 = vmatprep.subr.mxu0 0.0
    %214 = vmatpush1.msra.mxu0 0.0
    %215 = vmatprep.subr.mxu0 0.0
    %216 = vmatpush1.msra.mxu0 0.0
    %217 = vmatprep.subr.mxu0 0.0
    %218 = vmatpush1.msra.mxu0 0.0
    %219 = vmatprep.subr.mxu0 0.0
    %220 = vmatpush1.msra.mxu0 0.0
    %221 = vmatprep.subr.mxu0 0.0
    %222 = vmatpush1.msra.mxu0 0.0
    %223 = vmatprep.subr.mxu0 0.0
    %224 = vmatpush1.msra.mxu0 0.0
    %225 = vmatprep.subr.mxu0 0.0
    %226 = vmatpush1.msra.mxu0 0.0
    %227 = vmatprep.subr.mxu0 0.0
    %228 = vmatpush1.msra.mxu0 0.0
    %229 = vmatprep.subr.mxu0 0.0
    %230 = vmatpush1.msra.mxu0 0.0
    %231 = vmatprep.subr.mxu0 0.0
    %232 = vmatpush1.msra.mxu0 0.0
    %233 = vmatprep.subr.mxu0 0.0
    %234 = vmatpush1.msra.mxu0 0.0
    %235 = vmatprep.subr.mxu0 0.0
    %236 = vmatpush1.msra.mxu0 0.0
    %237 = vmatprep.subr.mxu0 0.0
    %238 = vmatpush1.msra.mxu0 0.0
    %239 = vmatprep.subr.mxu0 0.0
    %240 = vmatpush1.msra.mxu0 0.0
    %241 = vmatprep.subr.mxu0 0.0
    %242 = vmatpush1.msra.mxu0 %v209
    %243 = vmatprep.subr.mxu0 0.0
    %244 = vmatpush2.msra.mxu0 0.0
    %245 = vmatprep.subr.mxu0 0.0
    %246 = vmatpush2.msra.mxu0 0.0
    %247 = vmatprep.subr.mxu0 0.0
    %248 = vmatpush2.msra.mxu0 0.0
    %249 = vmatprep.subr.mxu0 0.0
    %250 = vmatpush2.msra.mxu0 0.0
    %251 = vmatprep.subr.mxu0 0.0
    %252 = vmatpush2.msra.mxu0 0.0
    %253 = vmatprep.subr.mxu0 0.0
    %254 = vmatpush2.msra.mxu0 0.0
    %255 = vmatprep.subr.mxu0 0.0
    %256 = vmatpush2.msra.mxu0 0.0
    %257 = vmatprep.subr.mxu0 0.0
    %258 = vmatpush2.msra.mxu0 0.0
    %259 = vmatprep.subr.mxu0 0.0
    %260 = vmatpush2.msra.mxu0 0.0
    %261 = vmatprep.subr.mxu0 0.0
    %262 = vmatpush2.msra.mxu0 0.0
    %263 = vmatprep.subr.mxu0 0.0
    %264 = vmatpush2.msra.mxu0 0.0
    %265 = vmatprep.subr.mxu0 0.0
    %266 = vmatpush2.msra.mxu0 0.0
    %267 = vmatprep.subr.mxu0 0.0
    %268 = vmatpush2.msra.mxu0 0.0
    %269 = vmatprep.subr.mxu0 0.0
    %270 = vmatpush2.msra.mxu0 0.0
    %271 = vmatprep.subr.mxu0 0.0
    %272 = vmatpush2.msra.mxu0 0.0
    %273 = vmatprep.subr.mxu0 0.0
    %274 = vmatpush2.msra.mxu0 0.0
    %275 = vmatprep.mubr.f32.mxu0 0.0
    %276 = vmatmul.mubr.f32.gmra.mxu0 %v205
    %v277 = vpop.f32.mrf.mxu0
    %v278 = vadd.f32 %v201, %v277
    %v279 = vpop.f32.mrf.mxu0
    %280 = vdwg.mxu0
    %v281 = vxor.u32 %v278, 2147483648
    %v282 = vmul.f32 %v281, 1.442695
    %v283 = vpow.pop %v282
    %v284 = vadd.f32 %v283, 1.0
    %v285 = vrcp.pop %v284
    %v286 = vmul.f32 1.0, %v285
    %v287 = vlaneseq
    %v288 = vshrl.u32 %v287, 7
    %v289 = vsub.s32 0, %v288
    %v290 = vrot.slane %v286, %v289
    %292 = vbcast.lane.b32.xlu0 %v290, 256
    %v293 = vpop.permute.xlu0 %292
    %s295 = sor.u32 256, 8
    %296 = vbcast.lane.b32.xlu0 %v290, %s295
    %v297 = vpop.permute.xlu0 %296
    %v298 = vlaneseq
    %v299 = vshrl.u32 %v298, 7
    %v300 = vsub.s32 1, %v299
    %v301 = vrot.slane %v286, %v300
    %303 = vbcast.lane.b32.xlu0 %v301, 256
    %v304 = vpop.permute.xlu0 %303
    %s306 = sor.u32 256, 8
    %307 = vbcast.lane.b32.xlu0 %v301, %s306
    %v308 = vpop.permute.xlu0 %307
    %v309 = vlaneseq
    %v310 = vshrl.u32 %v309, 7
    %v311 = vsub.s32 2, %v310
    %v312 = vrot.slane %v286, %v311
    %314 = vbcast.lane.b32.xlu0 %v312, 256
    %v315 = vpop.permute.xlu0 %314
    %s317 = sor.u32 256, 8
    %318 = vbcast.lane.b32.xlu0 %v312, %s317
    %v319 = vpop.permute.xlu0 %318
    %v320 = vmul.f32 %v35, %v293
    %v321 = vmul.f32 %v36, %v293
    %v322 = vmul.f32 %v37, %v297
    %v323 = vmul.f32 %v38, %v297
    %v324 = vmul.f32 %v39, %v304
    %v325 = vmul.f32 %v40, %v304
    %v326 = vmul.f32 %v41, %v308
    %v327 = vmul.f32 %v42, %v308
    %v328 = vmul.f32 %v43, %v315
    %v329 = vmul.f32 %v44, %v315
    %v330 = vmul.f32 %v45, %v319
    %v331 = vmul.f32 %v46, %v319
    %332 = vst [vmem:[#allocation5] sm:$0xff] %v320
    %333 = vst [vmem:[#allocation5 + $0x8] sm:$0xff] %v321
    %334 = vst [vmem:[#allocation5 + $0x10] sm:$0xff] %v322
    %335 = vst [vmem:[#allocation5 + $0x18] sm:$0xff] %v323
    %336 = vst [vmem:[#allocation5 + $0x20] sm:$0xff] %v324
    %337 = vst [vmem:[#allocation5 + $0x28] sm:$0xff] %v325
    %338 = vst [vmem:[#allocation5 + $0x30] sm:$0xff] %v326
    %339 = vst [vmem:[#allocation5 + $0x38] sm:$0xff] %v327
    %340 = vst [vmem:[#allocation5 + $0x40] sm:$0xff] %v328
    %341 = vst [vmem:[#allocation5 + $0x48] sm:$0xff] %v329
    %342 = vst [vmem:[#allocation5 + $0x50] sm:$0xff] %v330
    %343 = vst [vmem:[#allocation5 + $0x58] sm:$0xff] %v331
    // Predicated region
    $region26: #{tpu_custom_call.1} parent=1 // pred_check
      _
    $region27: #{tpu_custom_call.1} parent=1 // pred_check_branch
      %345 = sbr.rel (0) target = $region29
    $region28: #{tpu_custom_call.1} parent=1 // pred_region
      %s347 = ssub.s32 1536, 1536
      %348 = vsyncadd [#allocation4], %s347
      %s349 = sshll.u32 [#allocation5], 4
      %s350 = int_to_ptr.vmem [resolvable:$true] %s349
      %355 = dma.vmem_to_hbm [thread:$0]  %s350, 1536, %s5, [#allocation4], 256, 256, 16
    $region29: #{tpu_custom_call.1} parent=1 // pred_fallthru
      _
    // Predicated region
    $region30: #{tpu_custom_call.1} parent=1 // pred_check
      _
    $region31: #{tpu_custom_call.1} parent=1 // pred_check_branch
      %357 = sbr.rel (0) target = $region33
    $region32: #{tpu_custom_call.1} parent=1 // pred_region
      %358 = dma.done [#allocation4], 1536
    $region33: #{tpu_custom_call.1} parent=1 // pred_fallthru
      _
    %359 = vsyncpa [#allocation3], 1
    %360 = vsyncpa [#allocation4], 1

</llo_original>
